<compile_context>
chip_gen: v7x
topology: tpu7x:2x2x1
jax: 0.10.0
libtpu: 0.0.40
codegen_flags: <defaults>
</compile_context>

<pallas_src>
from functools import partial

import jax
import jax.numpy as jnp
from jax.experimental import pallas as pl
from jax.experimental.pallas import tpu as pltpu


# ----------------------------------------------------------------------------
# Pallas kernel: per-split softmax probs + per-split argmax (mode)
# Operates on transposed tiles: classes on sublanes, rows on lanes.
# ----------------------------------------------------------------------------
def _multicat_kernel(x_ref, probs_ref, mode_ref, *, action_dims):
    # x_ref:     (D, TN)  logits   (D = sum(action_dims) on sublanes)
    # probs_ref: (D, TN)  concatenated per-split softmax probabilities
    # mode_ref:  (S, TN)  per-split argmax indices (int32), S = len(action_dims)
    x = x_ref[...].astype(jnp.float32)
    _, tn = x.shape

    # --- per-split max (reused for softmax stabilization AND argmax) --------
    seg_maxes = []
    max_rows = []
    start = 0
    for d in action_dims:                         # static python loop, unrolled
        seg = x[start:start + d, :]               # (d, TN)
        m = jnp.max(seg, axis=0, keepdims=True)   # (1, TN) sublane reduce
        seg_maxes.append(m)
        max_rows.append(jnp.broadcast_to(m, (d, tn)))
        start += d
    max_map = jnp.concatenate(max_rows, axis=0)   # (D, TN)

    # single full-width exp (one EUP pass instead of one per split)
    e = jnp.exp(x - max_map)                      # (D, TN)

    # --- per-split sum -> reciprocal, and argmax via equality-with-max ------
    inv_rows = []
    mode_rows = []
    start = 0
    for k, d in enumerate(action_dims):
        es = e[start:start + d, :]                       # (d, TN)
        s = jnp.sum(es, axis=0, keepdims=True)           # (1, TN) sublane reduce
        inv = pl.reciprocal(s, approx=False)             # exact: keep probs ~1e-7
        inv_rows.append(jnp.broadcast_to(inv, (d, tn)))

        # argmax: reuse the softmax max; first-maximal-index tie-break
        seg = x[start:start + d, :]
        row_idx = jax.lax.broadcasted_iota(jnp.int32, (d, tn), 0)
        idx = jnp.where(seg == seg_maxes[k], row_idx, d)
        mode_rows.append(jnp.min(idx, axis=0, keepdims=True).astype(jnp.int32))
        start += d

    inv_map = jnp.concatenate(inv_rows, axis=0)          # (D, TN)
    # single full-width multiply + single contiguous (unmasked) stores
    probs_ref[...] = (e * inv_map).astype(probs_ref.dtype)
    mode_ref[...] = jnp.concatenate(mode_rows, axis=0)


# ----------------------------------------------------------------------------
# Wrapper: tiling over N, padding, transposed lane-dense layout
# ----------------------------------------------------------------------------
def _choose_row_tile(n, d_total):
    # Target ~2 MiB per f32 input block; lane axis must be a multiple of 128.
    # Kept well under the v7x scoped-VMEM budget (64 MiB physical, 32 MiB
    # scoped default) even with double-buffered in+out blocks.
    target_bytes = 2 << 20
    tn = (target_bytes // (4 * d_total)) // 128 * 128
    tn = int(max(128, min(tn, 32768)))
    n128 = -(-n // 128) * 128            # don't over-pad tiny problems
    return min(tn, n128)


def _multicat_pallas(x2d_t, action_dims):
    # x2d_t: (D, N) transposed logits (rows lane-dense)
    d_total, n = x2d_t.shape
    n_splits = len(action_dims)
    tn = _choose_row_tile(n, d_total)
    n_pad = -(-n // tn) * tn
    if n_pad != n:
        # pad rows with zeros; padded columns are sliced off below
        x2d_t = jnp.pad(x2d_t, ((0, 0), (0, n_pad - n)))

    kernel = partial(_multicat_kernel, action_dims=tuple(action_dims))
    probs_t, mode_t = pl.pallas_call(
        kernel,
        out_shape=(
            jax.ShapeDtypeStruct((d_total, n_pad), jnp.float32),
            jax.ShapeDtypeStruct((n_splits, n_pad), jnp.int32),
        ),
        grid=(n_pad // tn,),
        in_specs=[pl.BlockSpec((d_total, tn), lambda i: (0, i))],
        out_specs=(
            pl.BlockSpec((d_total, tn), lambda i: (0, i)),
            pl.BlockSpec((n_splits, tn), lambda i: (0, i)),
        ),
        compiler_params=pltpu.CompilerParams(
            dimension_semantics=("parallel",)),
    )(x2d_t)
    return probs_t[:, :n], mode_t[:, :n]


# ----------------------------------------------------------------------------
# JAX-side distribution wrappers (mirror the PyTorch classes)
# ----------------------------------------------------------------------------
class MultiCategorical:
    """Mirrors vima MultiCategorical: holds per-split probs, mode()."""

    def __init__(self, logits, action_dims):
        assert logits.ndim >= 2, logits.shape
        self._action_dims = tuple(action_dims)
        d_total = sum(self._action_dims)
        assert logits.shape[-1] == d_total, (
            f"sum of action dims {self._action_dims} != {logits.shape[-1]}")
        self.logits = logits

        batch_shape = logits.shape[:-1]
        # present the kernel a lane-dense (D, N) view; XLA handles the
        # transpose plumbing outside the kernel.
        x2d_t = logits.reshape((-1, d_total)).T
        probs_t, mode_t = _multicat_pallas(x2d_t, self._action_dims)
        self._probs = probs_t.T.reshape(batch_shape + (d_total,))
        self._mode = mode_t.T.reshape(batch_shape + (len(self._action_dims),))

    @property
    def probs(self):
        # concatenated per-split softmax probabilities, same layout as logits.
        # TODO(synk): emit bf16 probs / skip probs entirely on mode()-only
        # consumers to cut HBM write bytes (torch computes probs lazily).
        return self._probs

    def mode(self):
        # (..., n_splits); int32 (TPU-native index dtype) vs torch's int64.
        return self._mode


class MultiCategoricalHead:
    """Mirrors vima MultiCategoricalHead.forward."""

    def __init__(self, action_dims):
        self._action_dims = tuple(action_dims)

    def __call__(self, x):
        return MultiCategorical(logits=x, action_dims=self._action_dims)


# ----------------------------------------------------------------------------
# Demo / correctness check
# ----------------------------------------------------------------------------
if __name__ == "__main__":
    action_dims = [4, 6, 6]            # sum = 16
    batch, seq = 2, 8
    d_total = sum(action_dims)

    key = jax.random.PRNGKey(0)
    x = jax.random.normal(key, (batch, seq, d_total), dtype=jnp.float32)

    head = MultiCategoricalHead(action_dims)
    dist = head(x)

    probs = jax.block_until_ready(dist.probs)
    mode = jax.block_until_ready(dist.mode())

    # pure-JAX reference
    splits = jnp.split(x, [4, 10], axis=-1)   # cumulative offsets of action_dims
    ref_probs = jnp.concatenate(
        [jax.nn.softmax(s, axis=-1) for s in splits], axis=-1)
    ref_mode = jnp.stack(
        [jnp.argmax(s, axis=-1).astype(jnp.int32) for s in splits], axis=-1)

    assert probs.shape == (batch, seq, d_total)
    assert mode.shape == (batch, seq, len(action_dims))
    assert jnp.allclose(probs, ref_probs, atol=1e-5, rtol=1e-5)
    assert jnp.array_equal(mode, ref_mode)

    print("KERNEL_OK")
</pallas_src>

<mosaic_0001>
module attributes {stable_mosaic.version = 11 : i64} {
  func.func @_multicat_kernel(%arg0: i32, %arg1: memref<16x128xf32, #tpu.memory_space<vmem>>, %arg2: memref<16x128xf32, #tpu.memory_space<vmem>>, %arg3: memref<3x128xi32, #tpu.memory_space<vmem>>) attributes {dimension_semantics = [#tpu.dimension_semantics<parallel>], iteration_bounds = array<i64: 1>, scalar_prefetch = 0 : i64, scratch_operands = 0 : i64, tpu.core_type = #tpu.core_type<tc>, window_params = [{transform_indices = @transform_0, window_bounds = array<i64: 16, 128>}, {transform_indices = @transform_1, window_bounds = array<i64: 16, 128>}, {transform_indices = @transform_2, window_bounds = array<i64: 3, 128>}]} {
    %c0 = arith.constant 0 : index
    %c0_0 = arith.constant 0 : index
    %0 = vector.load %arg1[%c0, %c0_0] : memref<16x128xf32, #tpu.memory_space<vmem>>, vector<16x128xf32>
    %1 = vector.extract_strided_slice %0 {offsets = [0, 0], sizes = [4, 128], strides = [1, 1]} : vector<16x128xf32> to vector<4x128xf32>
    %cst = arith.constant dense<0xFF800000> : vector<128xf32>
    %2 = vector.multi_reduction <maximumf>, %1, %cst [0] : vector<4x128xf32> to vector<128xf32>
    %3 = vector.shape_cast %2 : vector<128xf32> to vector<1x128xf32>
    %4 = vector.shape_cast %3 : vector<1x128xf32> to vector<1x128xf32>
    %5 = vector.broadcast %4 : vector<1x128xf32> to vector<4x128xf32>
    %6 = vector.extract_strided_slice %0 {offsets = [4, 0], sizes = [6, 128], strides = [1, 1]} : vector<16x128xf32> to vector<6x128xf32>
    %cst_1 = arith.constant dense<0xFF800000> : vector<128xf32>
    %7 = vector.multi_reduction <maximumf>, %6, %cst_1 [0] : vector<6x128xf32> to vector<128xf32>
    %8 = vector.shape_cast %7 : vector<128xf32> to vector<1x128xf32>
    %9 = vector.shape_cast %8 : vector<1x128xf32> to vector<1x128xf32>
    %10 = vector.broadcast %9 : vector<1x128xf32> to vector<6x128xf32>
    %11 = vector.extract_strided_slice %0 {offsets = [10, 0], sizes = [6, 128], strides = [1, 1]} : vector<16x128xf32> to vector<6x128xf32>
    %cst_2 = arith.constant dense<0xFF800000> : vector<128xf32>
    %12 = vector.multi_reduction <maximumf>, %11, %cst_2 [0] : vector<6x128xf32> to vector<128xf32>
    %13 = vector.shape_cast %12 : vector<128xf32> to vector<1x128xf32>
    %14 = vector.shape_cast %13 : vector<1x128xf32> to vector<1x128xf32>
    %15 = vector.broadcast %14 : vector<1x128xf32> to vector<6x128xf32>
    %16 = tpu.concatenate %5, %10, %15 in 0 : vector<4x128xf32>, vector<6x128xf32>, vector<6x128xf32> -> vector<16x128xf32>
    %17 = arith.subf %0, %16 : vector<16x128xf32>
    %18 = math.exp %17 : vector<16x128xf32>
    %19 = vector.extract_strided_slice %18 {offsets = [0, 0], sizes = [4, 128], strides = [1, 1]} : vector<16x128xf32> to vector<4x128xf32>
    %cst_3 = arith.constant dense<0.000000e+00> : vector<128xf32>
    %20 = vector.multi_reduction <add>, %19, %cst_3 [0] : vector<4x128xf32> to vector<128xf32>
    %21 = vector.shape_cast %20 : vector<128xf32> to vector<1x128xf32>
    %22 = tpu.reciprocal %21 : vector<1x128xf32> -> vector<1x128xf32>
    %23 = vector.shape_cast %22 : vector<1x128xf32> to vector<1x128xf32>
    %24 = vector.broadcast %23 : vector<1x128xf32> to vector<4x128xf32>
    %25 = vector.extract_strided_slice %0 {offsets = [0, 0], sizes = [4, 128], strides = [1, 1]} : vector<16x128xf32> to vector<4x128xf32>
    %26 = tpu.iota {dimensions = array<i32: 0>} : vector<4x128xi32>
    %27 = vector.broadcast %3 : vector<1x128xf32> to vector<4x128xf32>
    %28 = arith.cmpf oeq, %25, %27 : vector<4x128xf32>
    %c4_i32 = arith.constant 4 : i32
    %29 = vector.broadcast %c4_i32 : i32 to vector<4x128xi32>
    %30 = arith.select %28, %26, %29 : vector<4x128xi1>, vector<4x128xi32>
    %cst_4 = arith.constant dense<2147483647> : vector<128xi32>
    %31 = vector.multi_reduction <minsi>, %30, %cst_4 [0] : vector<4x128xi32> to vector<128xi32>
    %32 = vector.shape_cast %31 : vector<128xi32> to vector<1x128xi32>
    %33 = vector.extract_strided_slice %18 {offsets = [4, 0], sizes = [6, 128], strides = [1, 1]} : vector<16x128xf32> to vector<6x128xf32>
    %cst_5 = arith.constant dense<0.000000e+00> : vector<128xf32>
    %34 = vector.multi_reduction <add>, %33, %cst_5 [0] : vector<6x128xf32> to vector<128xf32>
    %35 = vector.shape_cast %34 : vector<128xf32> to vector<1x128xf32>
    %36 = tpu.reciprocal %35 : vector<1x128xf32> -> vector<1x128xf32>
    %37 = vector.shape_cast %36 : vector<1x128xf32> to vector<1x128xf32>
    %38 = vector.broadcast %37 : vector<1x128xf32> to vector<6x128xf32>
    %39 = vector.extract_strided_slice %0 {offsets = [4, 0], sizes = [6, 128], strides = [1, 1]} : vector<16x128xf32> to vector<6x128xf32>
    %40 = tpu.iota {dimensions = array<i32: 0>} : vector<6x128xi32>
    %41 = vector.broadcast %8 : vector<1x128xf32> to vector<6x128xf32>
    %42 = arith.cmpf oeq, %39, %41 : vector<6x128xf32>
    %c6_i32 = arith.constant 6 : i32
    %43 = vector.broadcast %c6_i32 : i32 to vector<6x128xi32>
    %44 = arith.select %42, %40, %43 : vector<6x128xi1>, vector<6x128xi32>
    %cst_6 = arith.constant dense<2147483647> : vector<128xi32>
    %45 = vector.multi_reduction <minsi>, %44, %cst_6 [0] : vector<6x128xi32> to vector<128xi32>
    %46 = vector.shape_cast %45 : vector<128xi32> to vector<1x128xi32>
    %47 = vector.extract_strided_slice %18 {offsets = [10, 0], sizes = [6, 128], strides = [1, 1]} : vector<16x128xf32> to vector<6x128xf32>
    %cst_7 = arith.constant dense<0.000000e+00> : vector<128xf32>
    %48 = vector.multi_reduction <add>, %47, %cst_7 [0] : vector<6x128xf32> to vector<128xf32>
    %49 = vector.shape_cast %48 : vector<128xf32> to vector<1x128xf32>
    %50 = tpu.reciprocal %49 : vector<1x128xf32> -> vector<1x128xf32>
    %51 = vector.shape_cast %50 : vector<1x128xf32> to vector<1x128xf32>
    %52 = vector.broadcast %51 : vector<1x128xf32> to vector<6x128xf32>
    %53 = vector.extract_strided_slice %0 {offsets = [10, 0], sizes = [6, 128], strides = [1, 1]} : vector<16x128xf32> to vector<6x128xf32>
    %54 = tpu.iota {dimensions = array<i32: 0>} : vector<6x128xi32>
    %55 = vector.broadcast %13 : vector<1x128xf32> to vector<6x128xf32>
    %56 = arith.cmpf oeq, %53, %55 : vector<6x128xf32>
    %c6_i32_8 = arith.constant 6 : i32
    %57 = vector.broadcast %c6_i32_8 : i32 to vector<6x128xi32>
    %58 = arith.select %56, %54, %57 : vector<6x128xi1>, vector<6x128xi32>
    %cst_9 = arith.constant dense<2147483647> : vector<128xi32>
    %59 = vector.multi_reduction <minsi>, %58, %cst_9 [0] : vector<6x128xi32> to vector<128xi32>
    %60 = vector.shape_cast %59 : vector<128xi32> to vector<1x128xi32>
    %61 = tpu.concatenate %24, %38, %52 in 0 : vector<4x128xf32>, vector<6x128xf32>, vector<6x128xf32> -> vector<16x128xf32>
    %62 = arith.mulf %18, %61 : vector<16x128xf32>
    %c0_10 = arith.constant 0 : index
    %c0_11 = arith.constant 0 : index
    %63 = vector.load %arg2[%c0_10, %c0_11] : memref<16x128xf32, #tpu.memory_space<vmem>>, vector<16x128xf32>
    tpu.vector_store %arg2[%c0_10, %c0_11], %62 {strides = array<i32>} : memref<16x128xf32, #tpu.memory_space<vmem>>, vector<16x128xf32>,
    %64 = tpu.concatenate %32, %46, %60 in 0 : vector<1x128xi32>, vector<1x128xi32>, vector<1x128xi32> -> vector<3x128xi32>
    %c0_12 = arith.constant 0 : index
    %c0_13 = arith.constant 0 : index
    %65 = vector.load %arg3[%c0_12, %c0_13] : memref<3x128xi32, #tpu.memory_space<vmem>>, vector<3x128xi32>
    tpu.vector_store %arg3[%c0_12, %c0_13], %64 {strides = array<i32>} : memref<3x128xi32, #tpu.memory_space<vmem>>, vector<3x128xi32>,
    return
  }
  func.func @transform_0(%arg0: i32) -> (i32, i32) {
    %c0_i32 = arith.constant 0 : i32
    %c0_i32_0 = arith.constant 0 : i32
    return %c0_i32, %arg0 : i32, i32
  }
  func.func @transform_1(%arg0: i32) -> (i32, i32) {
    %c0_i32 = arith.constant 0 : i32
    %c0_i32_0 = arith.constant 0 : i32
    return %c0_i32, %arg0 : i32, i32
  }
  func.func @transform_2(%arg0: i32) -> (i32, i32) {
    %c0_i32 = arith.constant 0 : i32
    %c0_i32_0 = arith.constant 0 : i32
    return %c0_i32, %arg0 : i32, i32
  }
}

</mosaic_0001>

<llo_original>
// kernel: tpu_custom_call.1
$region0: #{tpu_custom_call.1}
  #allocation0 [shape = 'u32[]', space=smem, size = 0x4, offset = 0x4, fixed_abs, tag = 'smem constant byte address 0x4 - core index']
  #allocation1 [shape = 'u32[144,128]{1,0:T(1,128)}', space=vmem, size = 0x12000, scoped, tag = 'internal scratch']
  %s0 = inlined_call_operand.hbm [shape: f32[16,128], index: 0, kind: input, shape index: {}]
  %s1 = inlined_call_operand.hbm [shape: f32[16,128], index: 1, kind: output, shape index: {0}]
  %s2 = inlined_call_operand.hbm [shape: s32[3,128], index: 2, kind: output, shape index: {1}]
  %3 = xla_tuple %s1, %s2
  %s4 = sld [smem:[#allocation0]]
  $region26: #{tpu_custom_call.1} parent=0
    _
  %s6 = ssub.s32 1, %s4
  %s7 = scalar_select 0, %s6, %s4
  $region1: #{tpu_custom_call.1} parent=0
    #allocation2 [shape = 'u8[8192]{0}', space=vmem, size = 0x2000, scoped, tag = 'input window, operand 0, single buffered']
    #allocation3 [shape = 's32[1]{0}', space=sflag, size = 0x4, scoped, tag = 'scoped memory for tpu_custom_call.1']
    #allocation4 [shape = 's32[1]{0}', space=sflag, size = 0x4, scoped, tag = 'scoped memory for tpu_custom_call.1']
    #allocation5 [shape = 'u8[8192]{0}', space=vmem, size = 0x2000, scoped, tag = 'output window, operand 0, single buffered']
    #allocation6 [shape = 'u8[2048]{0}', space=vmem, size = 0x800, scoped, tag = 'output window, operand 1, single buffered']
    #allocation7 [shape = 's32[1]{0}', space=sflag, size = 0x4, scoped, tag = 'scoped memory for tpu_custom_call.1']
    %8 = vsyncpa [#allocation3], 0
    %9 = vsyncpa [#allocation4], 0
    %10 = vsyncpa [#allocation7], 0
    // Predicated region
    $region2: #{tpu_custom_call.1} parent=1 // pred_check
      _
    $region3: #{tpu_custom_call.1} parent=1 // pred_check_branch
      %12 = sbr.rel (0) target = $region5
    $region4: #{tpu_custom_call.1} parent=1 // pred_region
      %s14 = ssub.s32 256, 256
      %15 = vsyncadd [#allocation3], %s14
      %s16 = sshll.u32 [#allocation2], 4
      %s17 = int_to_ptr.vmem [resolvable:$true] %s16
      %22 = dma.hbm_to_vmem [thread:$0]  %s0, 256, %s17, [#allocation3], 128, 128, 8
    $region5: #{tpu_custom_call.1} parent=1 // pred_fallthru
      _
    // Predicated region
    $region6: #{tpu_custom_call.1} parent=1 // pred_check
      _
    $region7: #{tpu_custom_call.1} parent=1 // pred_check_branch
      %24 = sbr.rel (0) target = $region9
    $region8: #{tpu_custom_call.1} parent=1 // pred_region
      %25 = dma.done [#allocation3], 256
    $region9: #{tpu_custom_call.1} parent=1 // pred_fallthru
      _
    %v26 = vld [vmem:[#allocation2] sm:$0xff]
    %v27 = vld [vmem:[#allocation2 + $0x8] sm:$0xff]
    %vm28 = vcmask 1043456
    %v29 = vsel %vm28, %v26, -inf
    %v30 = vrot.slane %v29, 4
    %v31 = vmax.f32 %v29, %v30
    %v32 = vrot.slane %v31, 2
    %v33 = vmax.f32 %v31, %v32
    %v34 = vrot.slane %v33, 1
    %v35 = vmax.f32 %v33, %v34
    %vm36 = vcmask 1047556
    %v37 = vsel %vm36, %v26, -inf
    %vm38 = vcmask 1041408
    %v39 = vsel %vm38, %v27, -inf
    %v40 = vmax.f32 %v37, %v39
    %v41 = vrot.slane %v40, 4
    %v42 = vmax.f32 %v40, %v41
    %v43 = vrot.slane %v42, 2
    %v44 = vmax.f32 %v42, %v43
    %v45 = vrot.slane %v44, 1
    %v46 = vmax.f32 %v44, %v45
    %vm47 = vcmask 1047554
    %v48 = vsel %vm47, %v27, -inf
    %v49 = vrot.slane %v48, 4
    %v50 = vmax.f32 %v48, %v49
    %v51 = vrot.slane %v50, 2
    %v52 = vmax.f32 %v50, %v51
    %v53 = vrot.slane %v52, 1
    %v54 = vmax.f32 %v52, %v53
    %v55 = vsel %vm28, %v35, %v46
    %v56 = vsel %vm38, %v46, %v54
    %v57 = vsub.f32 %v26, %v55
    %v58 = vsub.f32 %v27, %v56
    %v59 = vmul.f32 %v57, 1.442695
    %v60 = vpow.pop %v59
    %v61 = vmul.f32 %v58, 1.442695
    %v62 = vpow.pop %v61
    %v63 = vsel %vm28, %v60, 0.0
    %v64 = vrot.slane %v63, 4
    %v65 = vadd.f32 %v63, %v64
    %v66 = vrot.slane %v65, 2
    %v67 = vadd.f32 %v65, %v66
    %v68 = vrot.slane %v67, 1
    %v69 = vadd.f32 %v67, %v68
    %v70 = vrcp.pop %v69
    %v71 = vlaneseq
    %v72 = vshrl.u32 %v71, 7
    %vm73 = vcmp.eq.f32.partialorder %v26, %v35
    %v74 = vsel %vm73, %v72, 4
    %v75 = vsel %vm28, %v74, 2147483647
    %v76 = vrot.slane %v75, 4
    %vm77 = vcmp.lt.s32.totalorder %v75, %v76
    %v78 = vsel %vm77, %v75, %v76
    %v79 = vrot.slane %v78, 2
    %vm80 = vcmp.lt.s32.totalorder %v78, %v79
    %v81 = vsel %vm80, %v78, %v79
    %v82 = vrot.slane %v81, 1
    %vm83 = vcmp.lt.s32.totalorder %v81, %v82
    %v84 = vsel %vm83, %v81, %v82
    %v87 = vrot.slane %v60, 4
    %v88 = vrot.slane %v62, 4
    %v89 = vsel %vm28, %v87, %v88
    %vm91 = vcmask 1045504
    %v92 = vsel %vm91, %v89, 0.0
    %v93 = vrot.slane %v92, 4
    %v94 = vadd.f32 %v92, %v93
    %v95 = vrot.slane %v94, 2
    %v96 = vadd.f32 %v94, %v95
    %v97 = vrot.slane %v96, 1
    %v98 = vadd.f32 %v96, %v97
    %v99 = vrcp.pop %v98
    %vm100 = vcmp.eq.f32.partialorder %v26, %v46
    %vm101 = vcmp.eq.f32.partialorder %v27, %v46
    %v102 = vrot.slane %v72, 4
    %v103 = vsel %vm100, %v102, 6
    %v104 = vsel %vm101, %v102, 6
    %v105 = vsel %vm36, %v103, 2147483647
    %v106 = vsel %vm38, %v104, 2147483647
    %vm107 = vcmp.lt.s32.totalorder %v105, %v106
    %v108 = vsel %vm107, %v105, %v106
    %v109 = vrot.slane %v108, 4
    %vm110 = vcmp.lt.s32.totalorder %v108, %v109
    %v111 = vsel %vm110, %v108, %v109
    %v112 = vrot.slane %v111, 2
    %vm113 = vcmp.lt.s32.totalorder %v111, %v112
    %v114 = vsel %vm113, %v111, %v112
    %v115 = vrot.slane %v114, 1
    %vm116 = vcmp.lt.s32.totalorder %v114, %v115
    %v117 = vsel %vm116, %v114, %v115
    %v118 = vrot.slane %v62, 2
    %v120 = vsel %vm91, %v118, 0.0
    %v121 = vrot.slane %v120, 4
    %v122 = vadd.f32 %v120, %v121
    %v123 = vrot.slane %v122, 2
    %v124 = vadd.f32 %v122, %v123
    %v125 = vrot.slane %v124, 1
    %v126 = vadd.f32 %v124, %v125
    %v127 = vrcp.pop %v126
    %vm128 = vcmp.eq.f32.partialorder %v27, %v54
    %v129 = vrot.slane %v72, 6
    %v130 = vsel %vm128, %v129, 6
    %v131 = vsel %vm47, %v130, 2147483647
    %v132 = vrot.slane %v131, 4
    %vm133 = vcmp.lt.s32.totalorder %v131, %v132
    %v134 = vsel %vm133, %v131, %v132
    %v135 = vrot.slane %v134, 2
    %vm136 = vcmp.lt.s32.totalorder %v134, %v135
    %v137 = vsel %vm136, %v134, %v135
    %v138 = vrot.slane %v137, 1
    %vm139 = vcmp.lt.s32.totalorder %v137, %v138
    %v140 = vsel %vm139, %v137, %v138
    %v141 = vsel %vm28, %v70, %v99
    %v142 = vsel %vm38, %v99, %v127
    %v143 = vmul.f32 %v60, %v141
    %v144 = vmul.f32 %v62, %v142
    %145 = vst [vmem:[#allocation5] sm:$0xff] %v143
    %146 = vst [vmem:[#allocation5 + $0x8] sm:$0xff] %v144
    %vm147 = vcmask 1040384
    %v148 = vsel %vm147, %v84, %v117
    %v149 = vsel %vm38, %v148, %v140
    %150 = vst [vmem:[#allocation6] sm:$0x7] %v149
    // Predicated region
    $region10: #{tpu_custom_call.1} parent=1 // pred_check
      _
    $region11: #{tpu_custom_call.1} parent=1 // pred_check_branch
      %152 = sbr.rel (0) target = $region13
    $region12: #{tpu_custom_call.1} parent=1 // pred_region
      %s154 = ssub.s32 256, 256
      %155 = vsyncadd [#allocation4], %s154
      %s156 = sshll.u32 [#allocation5], 4
      %s157 = int_to_ptr.vmem [resolvable:$true] %s156
      %162 = dma.vmem_to_hbm [thread:$0]  %s157, 256, %s1, [#allocation4], 128, 128, 8
    $region13: #{tpu_custom_call.1} parent=1 // pred_fallthru
      _
    // Predicated region
    $region14: #{tpu_custom_call.1} parent=1 // pred_check
      _
    $region15: #{tpu_custom_call.1} parent=1 // pred_check_branch
      %164 = sbr.rel (0) target = $region17
    $region16: #{tpu_custom_call.1} parent=1 // pred_region
      %s166 = ssub.s32 64, 64
      %167 = vsyncadd [#allocation7], %s166
      %s169 = sshll.u32 [#allocation6], 4
      %s170 = int_to_ptr.vmem [resolvable:$true] %s169
      %172 = dma.vmem_to_hbm [thread:$0]  %s170, 64, %s2, [#allocation7]
    $region17: #{tpu_custom_call.1} parent=1 // pred_fallthru
      _
    // Predicated region
    $region18: #{tpu_custom_call.1} parent=1 // pred_check
      _
    $region19: #{tpu_custom_call.1} parent=1 // pred_check_branch
      %174 = sbr.rel (0) target = $region21
    $region20: #{tpu_custom_call.1} parent=1 // pred_region
      %175 = dma.done [#allocation4], 256
    $region21: #{tpu_custom_call.1} parent=1 // pred_fallthru
      _
    // Predicated region
    $region22: #{tpu_custom_call.1} parent=1 // pred_check
      _
    $region23: #{tpu_custom_call.1} parent=1 // pred_check_branch
      %177 = sbr.rel (0) target = $region25
    $region24: #{tpu_custom_call.1} parent=1 // pred_region
      %178 = dma.done [#allocation7], 64
    $region25: #{tpu_custom_call.1} parent=1 // pred_fallthru
      _
    %179 = vsyncpa [#allocation3], 1
    %180 = vsyncpa [#allocation4], 1
    %181 = vsyncpa [#allocation7], 1

</llo_original>
